<compile_context>
chip_gen: v7x
topology: tpu7x:2x2x1
jax: 0.10.0
libtpu: 0.0.40
codegen_flags: <defaults>
</compile_context>

<pallas_src>
import functools

import jax
import jax.numpy as jnp
import numpy as np
from jax.experimental import pallas as pl
from jax.experimental.pallas import tpu as pltpu


def _round_up(x, m):
    return ((x + m - 1) // m) * m


def _cdiv(a, b):
    return -(-a // b)


# ----------------------------------------------------------------------------- kernel
def _embed_kernel(x_ref, idx_ref, w_ref, o_ref, *, n_cat, vocab, table_rows, r_pack, seq_len):
    """out = [onehot | x] @ Wfused  with Wfused = [blockdiag(T)xR ; blockdiag(W)xR].

    Sub-row r of packed row p is original row g = (i*TR + p)*R + r; its one-hot hits land in
    table block r (rows [r*m, (r+1)*m)): categorical k at r*m + k*vocab + id, and the
    positional-encoding(+bias) row at r*m + n_cat*vocab + (g mod seq_len).
    """
    tr = x_ref.shape[0]
    m = table_rows
    rm = r_pack * m

    x = x_ref[...]                                        # (TR, R*F)   float32
    idx = idx_ref[...]                                    # (TR, R*K)   int32

    lane = jax.lax.broadcasted_iota(jnp.int32, (tr, rm), 1)      # hoisted, shared by all compares
    row = jax.lax.broadcasted_iota(jnp.int32, (tr, 1), 0)
    g0 = (pl.program_id(0) * tr + row) * r_pack                   # original row of sub-row r=0

    hit = None
    for r in range(r_pack):                                       # tiny static loops -> unrolled
        base = r * m
        for k in range(n_cat):
            col = r * n_cat + k
            tgt = base + k * vocab + idx[:, col:col + 1]
            h = lane == tgt
            hit = h if hit is None else (hit | h)
        # positional-encoding (+ folded bias) row: (g0 + r) mod seq_len
        g = g0 + r
        if (seq_len & (seq_len - 1)) == 0:                         # power-of-two fast path
            pos = jnp.bitwise_and(g, seq_len - 1)
        else:
            # float divide + one-step correction: exact for |g| << 2^22
            q = jnp.floor(g.astype(jnp.float32) / float(seq_len)).astype(jnp.int32)
            pos = g - q * seq_len
            pos = jnp.where(pos < 0, pos + seq_len, pos)
            pos = jnp.where(pos >= seq_len, pos - seq_len, pos)
        tgt = base + n_cat * vocab + pos
        h = lane == tgt
        hit = h if hit is None else (hit | h)

    onehot = hit.astype(jnp.float32)                               # single cast at the end
    lhs = jnp.concatenate([onehot, x], axis=1)                     # (TR, R*m + R*F)
    o_ref[...] = jnp.dot(lhs, w_ref[...], preferred_element_type=jnp.float32)


def _pick_tile_rows(n_packed):
    """Packed-row tile: big (up to 2048 packed = 8192 original rows) but >=2 grid steps
    when there is enough work (v7x has two TensorCores on the 'parallel' axis)."""
    if n_packed <= 8:
        return max(n_packed, 1)                    # single full-extent block
    cap = 2048
    t = min(cap, (n_packed // 8) * 8)
    if n_packed >= 256:
        t = min(t, max(64, _round_up(_cdiv(n_packed, 4), 8)))
    elif n_packed >= 64:
        t = min(t, max(32, _round_up(_cdiv(n_packed, 2), 8)))
    return max(t, 8)


def _embed_pallas(x_pk, idx_pk, w_fused, *, n_cat, vocab, table_rows, r_pack, seq_len, tile_rows):
    n_packed, rf = x_pk.shape
    rk = idx_pk.shape[1]
    rows_w, rsize = w_fused.shape
    grid = (pl.cdiv(n_packed, tile_rows),)         # ragged last block handled by Pallas
    kern = functools.partial(_embed_kernel, n_cat=n_cat, vocab=vocab,
                             table_rows=table_rows, r_pack=r_pack, seq_len=seq_len)
    return pl.pallas_call(
        kern,
        out_shape=jax.ShapeDtypeStruct((n_packed, rsize), jnp.float32),
        grid_spec=pltpu.PrefetchScalarGridSpec(
            num_scalar_prefetch=0,
            grid=grid,
            in_specs=[
                pl.BlockSpec((tile_rows, rf), lambda i: (i, 0)),   # packed numeric features
                pl.BlockSpec((tile_rows, rk), lambda i: (i, 0)),   # packed categorical ids
                pl.BlockSpec((rows_w, rsize), lambda i: (0, 0)),   # fused [T;W] matrix (resident)
            ],
            out_specs=pl.BlockSpec((tile_rows, rsize), lambda i: (i, 0)),
        ),
        compiler_params=pltpu.CompilerParams(dimension_semantics=("parallel",)),
    )(x_pk, idx_pk, w_fused)


# ----------------------------------------------------------------------------- packing
def _pack_fused(w_base, t_base, r_pack):
    """Build the fused block-diagonal matrix: rows [0, R*m) are R diagonal copies of the
    table T (embeddings + PE/bias rows), rows [R*m, R*m + R*F) are R diagonal copies of the
    per-feature linear placement matrix W.  Column block r holds output columns of sub-row r."""
    f_rows, size = w_base.shape
    m_rows = t_base.shape[0]
    out = np.zeros((r_pack * (m_rows + f_rows), r_pack * size), np.float32)
    for r in range(r_pack):
        cs = r * size
        out[r * m_rows:(r + 1) * m_rows, cs:cs + size] = t_base
        ro = r_pack * m_rows + r * f_rows
        out[ro:ro + f_rows, cs:cs + size] = w_base
    return jnp.asarray(out)


def _positional_encoding(size, seq_len):
    pos = jnp.arange(seq_len, dtype=jnp.float32)[:, None]
    div = jnp.exp(jnp.arange(0, size, 2, dtype=jnp.float32) * (-jnp.log(10000.0) / size))
    pe = jnp.zeros((seq_len, size), jnp.float32)
    pe = pe.at[:, 0::2].set(jnp.sin(pos * div))
    pe = pe.at[:, 1::2].set(jnp.cos(pos * div))
    return pe[None]                                           # (1, seq_len, size)


# ----------------------------------------------------------------------------- module
class SAESTAREmbeddingPallas:
    def __init__(self, src_dims, dist_dims, type_dims, num_types, num_types_dist,
                 sequence_length_src=10, key=None):
        if key is None:
            key = jax.random.PRNGKey(0)
        self.src_dims = list(src_dims)
        self.dist_dims = list(dist_dims)
        self.type_dims = list(type_dims)
        self.num_types = int(num_types)
        self.num_types_dist = int(num_types_dist)
        self.num_features = len(src_dims)
        self.size = sum(src_dims)
        self.seq_len_pe = int(sequence_length_src)

        keys = iter(jax.random.split(key, 64))

        # --- src parameters: Linear(1, d) per numeric feature + Embedding(num_types, last dim)
        self.src_w, self.src_b = [], []
        for d in self.src_dims[:-1]:
            self.src_w.append(jax.random.uniform(next(keys), (d,), jnp.float32, -1.0, 1.0))
            self.src_b.append(jax.random.uniform(next(keys), (d,), jnp.float32, -1.0, 1.0))
        self.src_emb = jax.random.normal(next(keys), (self.num_types, self.src_dims[-1]),
                                         jnp.float32)

        # --- dist parameters: Linear(1, d) per dist feature + Embedding(vocab_dist, t) per type
        self.dist_pairs = min(len(self.dist_dims), len(self.type_dims))
        self.vocab_dist = self.num_types_dist + self.num_types
        self.dist_w, self.dist_b, self.dist_emb = [], [], []
        for i in range(self.dist_pairs):
            dd, td = self.dist_dims[i], self.type_dims[i]
            self.dist_w.append(jax.random.uniform(next(keys), (dd,), jnp.float32, -1.0, 1.0))
            self.dist_b.append(jax.random.uniform(next(keys), (dd,), jnp.float32, -1.0, 1.0))
            self.dist_emb.append(jax.random.normal(next(keys), (self.vocab_dist, td),
                                                   jnp.float32))

        self.pe_src = _positional_encoding(self.size, self.seq_len_pe)
        self.pe_dist = _positional_encoding(self.size, self.seq_len_pe)

        # --- base (unpacked) placement matrices -------------------------------------------
        f_src = self.num_features - 1
        w_src = np.zeros((f_src, self.size), np.float32)
        b_src = np.zeros((self.size,), np.float32)
        start = 0
        for i, d in enumerate(self.src_dims[:-1]):
            w_src[i, start:start + d] = np.asarray(self.src_w[i])
            b_src[start:start + d] = np.asarray(self.src_b[i])
            start += d
        e_src = np.zeros((self.num_types, self.size), np.float32)
        e_src[:, start:start + self.src_dims[-1]] = np.asarray(self.src_emb)
        pe_b_src = np.asarray(self.pe_src[0]) + b_src[None, :]               # (L, size)
        t_src = np.concatenate([e_src, pe_b_src], axis=0)                    # (num_types + L, size)

        pairs, V = self.dist_pairs, self.vocab_dist
        w_dist = np.zeros((pairs, self.size), np.float32)
        b_dist = np.zeros((self.size,), np.float32)
        e_dist = np.zeros((pairs * V, self.size), np.float32)
        start = 0
        for i in range(pairs):
            td, dd = self.type_dims[i], self.dist_dims[i]
            e_dist[i * V:(i + 1) * V, start:start + td] = np.asarray(self.dist_emb[i])
            start += td
            w_dist[i, start:start + dd] = np.asarray(self.dist_w[i])
            b_dist[start:start + dd] = np.asarray(self.dist_b[i])
            start += dd
        pe_b_dist = np.asarray(self.pe_dist[0]) + b_dist[None, :]
        t_dist = np.concatenate([e_dist, pe_b_dist], axis=0)                 # (pairs*V + L, size)

        # --- lane-dense R-way packing: R consecutive rows share one (R*size)-wide output row
        if 0 < self.size < 128 and 128 % self.size == 0:
            self.r_pack = 128 // self.size
        else:
            self.r_pack = 1
        self.f_src_num = f_src
        self.f_dist_num = pairs
        self.m_src = t_src.shape[0]
        self.m_dist = t_dist.shape[0]
        self.w_fused_src = _pack_fused(w_src, t_src, self.r_pack)
        self.w_fused_dist = _pack_fused(w_dist, t_dist, self.r_pack)

    def __call__(self, input_tensor, is_src=True, src_tensor=None, type_tensor=None):
        b, s, _ = input_tensor.shape
        assert s <= self.seq_len_pe, "sequence longer than positional-encoding table"
        n = b * s
        r = self.r_pack
        if is_src:
            x_num = input_tensor[:, :, : self.num_features - 1].reshape(n, -1)
            x_num = x_num.astype(jnp.float32)
            # PyTorch module hard-codes feature column 3 for the src categorical feature.
            cat = input_tensor[:, :, 3].astype(jnp.int32).reshape(n, 1)
            w_fused, n_cat, vocab, m = self.w_fused_src, 1, self.num_types, self.m_src
        else:
            p = self.dist_pairs
            x_num = input_tensor[:, :, :p].reshape(n, p).astype(jnp.float32)
            cat = type_tensor[:, :, :p].astype(jnp.int32).reshape(n, p)
            w_fused, n_cat, vocab, m = self.w_fused_dist, p, self.vocab_dist, self.m_dist

        # pad rows only to a multiple of r_pack (<= r_pack-1 rows, negligible); padded rows
        # hit table row 0 / pos 0 (always valid) and are sliced off below.
        n_r = _round_up(n, r)
        if n_r != n:
            pad = n_r - n
            x_num = jnp.pad(x_num, ((0, pad), (0, 0)))
            cat = jnp.pad(cat, ((0, pad), (0, 0)))
        n_packed = n_r // r
        x_pk = x_num.reshape(n_packed, r * x_num.shape[1])        # contiguous, free
        idx_pk = cat.reshape(n_packed, r * n_cat)                 # contiguous, free

        tile_rows = _pick_tile_rows(n_packed)
        out = _embed_pallas(x_pk, idx_pk, w_fused, n_cat=n_cat, vocab=vocab,
                            table_rows=m, r_pack=r, seq_len=s, tile_rows=tile_rows)
        return out.reshape(n_r, self.size)[:n].reshape(b, s, self.size)


# ------------------------------------------------------------------- pure-JAX reference
def reference_forward(m, x, is_src=True, type_tensor=None):
    b, s, _ = x.shape
    out = jnp.zeros((b, s, m.size), jnp.float32)
    if is_src:
        start = 0
        for i, d in enumerate(m.src_dims[:-1]):
            lin = x[:, :, i:i + 1].astype(jnp.float32) * m.src_w[i] + m.src_b[i]
            out = out.at[:, :, start:start + d].set(lin)
            start += d
        idx = x[:, :, 3].astype(jnp.int32)
        out = out.at[:, :, start:].set(m.src_emb[idx])
        out = out + m.pe_src[:, :s]
    else:
        start = 0
        for i in range(m.dist_pairs):
            td, dd = m.type_dims[i], m.dist_dims[i]
            emb = m.dist_emb[i][type_tensor[:, :, i].astype(jnp.int32)]
            out = out.at[:, :, start:start + td].set(emb)
            start += td
            lin = x[:, :, i:i + 1].astype(jnp.float32) * m.dist_w[i] + m.dist_b[i]
            out = out.at[:, :, start:start + dd].set(lin)
            start += dd
        out = out + m.pe_dist[:, :s]
    return out


# --------------------------------------------------------------------------------- main
if __name__ == "__main__":
    src_dims = [8, 8, 8, 8]        # size = 32, 4 features (feature 3 is categorical)
    dist_dims = [6, 6]
    type_dims = [10, 10]           # 10+6+10+6 = 32 == size
    num_types, num_types_dist = 5, 7
    B, S = 2, 8

    model = SAESTAREmbeddingPallas(src_dims, dist_dims, type_dims, num_types,
                                   num_types_dist, sequence_length_src=S,
                                   key=jax.random.PRNGKey(0))

    k1, k2, k3, k4, k5 = jax.random.split(jax.random.PRNGKey(0), 5)
    x_src_num = jax.random.normal(k1, (B, S, 3), jnp.float32)
    x_src_cat = jax.random.randint(k2, (B, S, 1), 0, num_types).astype(jnp.float32)
    x_src = jnp.concatenate([x_src_num, x_src_cat], axis=-1)            # (B, S, 4)

    x_dist = jax.random.normal(k3, (B, S, 2), jnp.float32)              # (B, S, 2)
    t_dist = jax.random.randint(k4, (B, S, 2), 0, num_types + num_types_dist)

    out_src = model(x_src, is_src=True)
    out_dist = model(x_dist, is_src=False, type_tensor=t_dist)
    jax.block_until_ready((out_src, out_dist))

    ref_src = reference_forward(model, x_src, True)
    ref_dist = reference_forward(model, x_dist, False, t_dist)
    np.testing.assert_allclose(np.asarray(out_src), np.asarray(ref_src),
                               rtol=1e-2, atol=1e-2)
    np.testing.assert_allclose(np.asarray(out_dist), np.asarray(ref_dist),
                               rtol=1e-2, atol=1e-2)

    # larger batch exercises the multi-step (ragged) row grid
    xb_num = jax.random.normal(k5, (6, S, 3), jnp.float32)
    xb_cat = jax.random.randint(k2, (6, S, 1), 0, num_types).astype(jnp.float32)
    x_big = jnp.concatenate([xb_num, xb_cat], axis=-1)
    out_big = model(x_big, is_src=True)
    jax.block_until_ready(out_big)
    np.testing.assert_allclose(np.asarray(out_big),
                               np.asarray(reference_forward(model, x_big, True)),
                               rtol=1e-2, atol=1e-2)

    print("KERNEL_OK")
</pallas_src>

<mosaic_0001>
module attributes {stable_mosaic.version = 11 : i64} {
  func.func @_embed_kernel(%arg0: i32, %arg1: memref<4x12xf32, #tpu.memory_space<vmem>>, %arg2: memref<4x4xi32, #tpu.memory_space<vmem>>, %arg3: memref<64x128xf32, #tpu.memory_space<vmem>>, %arg4: memref<4x128xf32, #tpu.memory_space<vmem>>) attributes {dimension_semantics = [#tpu.dimension_semantics<parallel>], iteration_bounds = array<i64: 1>, scalar_prefetch = 0 : i64, scratch_operands = 0 : i64, tpu.core_type = #tpu.core_type<tc>, window_params = [{transform_indices = @transform_0, window_bounds = array<i64: 4, 12>}, {transform_indices = @transform_1, window_bounds = array<i64: 4, 4>}, {pipeline_mode = #tpu.pipeline_mode<synchronous>, transform_indices = @transform_2, window_bounds = array<i64: 64, 128>}, {transform_indices = @transform_3, window_bounds = array<i64: 4, 128>}]} {
    %c0 = arith.constant 0 : index
    %c0_0 = arith.constant 0 : index
    %0 = vector.load %arg1[%c0, %c0_0] : memref<4x12xf32, #tpu.memory_space<vmem>>, vector<4x12xf32>
    %c0_1 = arith.constant 0 : index
    %c0_2 = arith.constant 0 : index
    %1 = vector.load %arg2[%c0_1, %c0_2] : memref<4x4xi32, #tpu.memory_space<vmem>>, vector<4x4xi32>
    %2 = tpu.iota {dimensions = array<i32: 1>} : vector<4x52xi32>
    %3 = tpu.iota {dimensions = array<i32: 0>} : vector<4x1xi32>
    %c4_i32 = arith.constant 4 : i32
    %4 = arith.muli %arg0, %c4_i32 : i32
    %5 = vector.broadcast %4 : i32 to vector<4x1xi32>
    %6 = arith.addi %5, %3 : vector<4x1xi32>
    %c4_i32_3 = arith.constant 4 : i32
    %7 = vector.broadcast %c4_i32_3 : i32 to vector<4x1xi32>
    %8 = arith.muli %6, %7 : vector<4x1xi32>
    %9 = vector.extract_strided_slice %1 {offsets = [0, 0], sizes = [4, 1], strides = [1, 1]} : vector<4x4xi32> to vector<4x1xi32>
    %c0_i32 = arith.constant 0 : i32
    %10 = vector.broadcast %c0_i32 : i32 to vector<4x1xi32>
    %11 = arith.addi %10, %9 : vector<4x1xi32>
    %12 = vector.broadcast %11 : vector<4x1xi32> to vector<4x52xi32>
    %13 = arith.cmpi eq, %2, %12 : vector<4x52xi32>
    %c0_i32_4 = arith.constant 0 : i32
    %14 = vector.broadcast %c0_i32_4 : i32 to vector<4x1xi32>
    %15 = arith.addi %8, %14 : vector<4x1xi32>
    %c7_i32 = arith.constant 7 : i32
    %16 = vector.broadcast %c7_i32 : i32 to vector<4x1xi32>
    %17 = arith.andi %15, %16 : vector<4x1xi32>
    %c5_i32 = arith.constant 5 : i32
    %18 = vector.broadcast %c5_i32 : i32 to vector<4x1xi32>
    %19 = arith.addi %18, %17 : vector<4x1xi32>
    %20 = vector.broadcast %19 : vector<4x1xi32> to vector<4x52xi32>
    %21 = arith.cmpi eq, %2, %20 : vector<4x52xi32>
    %22 = arith.ori %13, %21 : vector<4x52xi1>
    %23 = vector.extract_strided_slice %1 {offsets = [0, 1], sizes = [4, 1], strides = [1, 1]} : vector<4x4xi32> to vector<4x1xi32>
    %c13_i32 = arith.constant 13 : i32
    %24 = vector.broadcast %c13_i32 : i32 to vector<4x1xi32>
    %25 = arith.addi %24, %23 : vector<4x1xi32>
    %26 = vector.broadcast %25 : vector<4x1xi32> to vector<4x52xi32>
    %27 = arith.cmpi eq, %2, %26 : vector<4x52xi32>
    %28 = arith.ori %22, %27 : vector<4x52xi1>
    %c1_i32 = arith.constant 1 : i32
    %29 = vector.broadcast %c1_i32 : i32 to vector<4x1xi32>
    %30 = arith.addi %8, %29 : vector<4x1xi32>
    %c7_i32_5 = arith.constant 7 : i32
    %31 = vector.broadcast %c7_i32_5 : i32 to vector<4x1xi32>
    %32 = arith.andi %30, %31 : vector<4x1xi32>
    %c18_i32 = arith.constant 18 : i32
    %33 = vector.broadcast %c18_i32 : i32 to vector<4x1xi32>
    %34 = arith.addi %33, %32 : vector<4x1xi32>
    %35 = vector.broadcast %34 : vector<4x1xi32> to vector<4x52xi32>
    %36 = arith.cmpi eq, %2, %35 : vector<4x52xi32>
    %37 = arith.ori %28, %36 : vector<4x52xi1>
    %38 = vector.extract_strided_slice %1 {offsets = [0, 2], sizes = [4, 1], strides = [1, 1]} : vector<4x4xi32> to vector<4x1xi32>
    %c26_i32 = arith.constant 26 : i32
    %39 = vector.broadcast %c26_i32 : i32 to vector<4x1xi32>
    %40 = arith.addi %39, %38 : vector<4x1xi32>
    %41 = vector.broadcast %40 : vector<4x1xi32> to vector<4x52xi32>
    %42 = arith.cmpi eq, %2, %41 : vector<4x52xi32>
    %43 = arith.ori %37, %42 : vector<4x52xi1>
    %c2_i32 = arith.constant 2 : i32
    %44 = vector.broadcast %c2_i32 : i32 to vector<4x1xi32>
    %45 = arith.addi %8, %44 : vector<4x1xi32>
    %c7_i32_6 = arith.constant 7 : i32
    %46 = vector.broadcast %c7_i32_6 : i32 to vector<4x1xi32>
    %47 = arith.andi %45, %46 : vector<4x1xi32>
    %c31_i32 = arith.constant 31 : i32
    %48 = vector.broadcast %c31_i32 : i32 to vector<4x1xi32>
    %49 = arith.addi %48, %47 : vector<4x1xi32>
    %50 = vector.broadcast %49 : vector<4x1xi32> to vector<4x52xi32>
    %51 = arith.cmpi eq, %2, %50 : vector<4x52xi32>
    %52 = arith.ori %43, %51 : vector<4x52xi1>
    %53 = vector.extract_strided_slice %1 {offsets = [0, 3], sizes = [4, 1], strides = [1, 1]} : vector<4x4xi32> to vector<4x1xi32>
    %c39_i32 = arith.constant 39 : i32
    %54 = vector.broadcast %c39_i32 : i32 to vector<4x1xi32>
    %55 = arith.addi %54, %53 : vector<4x1xi32>
    %56 = vector.broadcast %55 : vector<4x1xi32> to vector<4x52xi32>
    %57 = arith.cmpi eq, %2, %56 : vector<4x52xi32>
    %58 = arith.ori %52, %57 : vector<4x52xi1>
    %c3_i32 = arith.constant 3 : i32
    %59 = vector.broadcast %c3_i32 : i32 to vector<4x1xi32>
    %60 = arith.addi %8, %59 : vector<4x1xi32>
    %c7_i32_7 = arith.constant 7 : i32
    %61 = vector.broadcast %c7_i32_7 : i32 to vector<4x1xi32>
    %62 = arith.andi %60, %61 : vector<4x1xi32>
    %c44_i32 = arith.constant 44 : i32
    %63 = vector.broadcast %c44_i32 : i32 to vector<4x1xi32>
    %64 = arith.addi %63, %62 : vector<4x1xi32>
    %65 = vector.broadcast %64 : vector<4x1xi32> to vector<4x52xi32>
    %66 = arith.cmpi eq, %2, %65 : vector<4x52xi32>
    %67 = arith.ori %58, %66 : vector<4x52xi1>
    %68 = arith.extui %67 : vector<4x52xi1> to vector<4x52xi32>
    %69 = arith.sitofp %68 : vector<4x52xi32> to vector<4x52xf32>
    %70 = tpu.concatenate %69, %0 in 1 : vector<4x52xf32>, vector<4x12xf32> -> vector<4x64xf32>
    %c0_8 = arith.constant 0 : index
    %c0_9 = arith.constant 0 : index
    %71 = vector.load %arg3[%c0_8, %c0_9] : memref<64x128xf32, #tpu.memory_space<vmem>>, vector<64x128xf32>
    %cst = arith.constant dense<0.000000e+00> : vector<4x128xf32>
    %72 = tpu.matmul %70, %71, %cst {dimension_numbers = #tpu.dot_dimension_numbers<[1], [0], [0], [1], [0, 0, 1, 1], [], []>} : vector<4x64xf32>, vector<64x128xf32>, vector<4x128xf32> -> vector<4x128xf32>
    %c0_10 = arith.constant 0 : index
    %c0_11 = arith.constant 0 : index
    %73 = vector.load %arg4[%c0_10, %c0_11] : memref<4x128xf32, #tpu.memory_space<vmem>>, vector<4x128xf32>
    tpu.vector_store %arg4[%c0_10, %c0_11], %72 {strides = array<i32>} : memref<4x128xf32, #tpu.memory_space<vmem>>, vector<4x128xf32>,
    return
  }
  func.func @transform_0(%arg0: i32) -> (i32, i32) {
    %c0_i32 = arith.constant 0 : i32
    %c0_i32_0 = arith.constant 0 : i32
    return %arg0, %c0_i32 : i32, i32
  }
  func.func @transform_1(%arg0: i32) -> (i32, i32) {
    %c0_i32 = arith.constant 0 : i32
    %c0_i32_0 = arith.constant 0 : i32
    return %arg0, %c0_i32 : i32, i32
  }
  func.func @transform_2(%arg0: i32) -> (i32, i32) {
    %c0_i32 = arith.constant 0 : i32
    %c0_i32_0 = arith.constant 0 : i32
    %c0_i32_1 = arith.constant 0 : i32
    return %c0_i32, %c0_i32_0 : i32, i32
  }
  func.func @transform_3(%arg0: i32) -> (i32, i32) {
    %c0_i32 = arith.constant 0 : i32
    %c0_i32_0 = arith.constant 0 : i32
    return %arg0, %c0_i32 : i32, i32
  }
}

</mosaic_0001>

<llo_original>
// kernel: tpu_custom_call.1
$region0: #{tpu_custom_call.1}
  #allocation0 [shape = 'u32[]', space=smem, size = 0x4, offset = 0x4, fixed_abs, tag = 'smem constant byte address 0x4 - core index']
  #allocation1 [shape = 'u32[144,128]{1,0:T(1,128)}', space=vmem, size = 0x12000, scoped, tag = 'internal scratch']
  %s0 = inlined_call_operand.hbm [shape: f32[4,12], index: 0, kind: input, shape index: {}]
  %s1 = inlined_call_operand.hbm [shape: s32[4,4], index: 1, kind: input, shape index: {}]
  %s2 = inlined_call_operand.hbm [shape: f32[64,128], index: 2, kind: input, shape index: {}]
  %s3 = inlined_call_operand.hbm [shape: f32[4,128], index: 3, kind: output, shape index: {}]
  %s4 = sld [smem:[#allocation0]]
  $region34: #{tpu_custom_call.1} parent=0
    _
  %s6 = ssub.s32 1, %s4
  %s7 = scalar_select 0, %s6, %s4
  $region1: #{tpu_custom_call.1} parent=0
    #allocation2 [shape = 'u8[2048]{0}', space=vmem, size = 0x800, scoped, tag = 'input window, operand 0, single buffered']
    #allocation3 [shape = 's32[1]{0}', space=sflag, size = 0x4, scoped, tag = 'scoped memory for tpu_custom_call.1']
    #allocation4 [shape = 's32[1]{0}', space=sflag, size = 0x4, scoped, tag = 'scoped memory for tpu_custom_call.1']
    #allocation5 [shape = 'u8[2048]{0}', space=vmem, size = 0x800, scoped, tag = 'input window, operand 1, single buffered']
    #allocation6 [shape = 's32[1]{0}', space=sflag, size = 0x4, scoped, tag = 'scoped memory for tpu_custom_call.1']
    #allocation7 [shape = 'u8[32768]{0}', space=vmem, size = 0x8000, scoped, tag = 'input window, operand 2, single buffered']
    #allocation8 [shape = 'u8[2048]{0}', space=vmem, size = 0x800, scoped, tag = 'output window, operand 0, single buffered']
    %8 = vsyncpa [#allocation3], 0
    %9 = vsyncpa [#allocation6], 0
    %10 = vsyncpa [#allocation4], 0
    // Predicated region
    $region2: #{tpu_custom_call.1} parent=1 // pred_check
      _
    $region3: #{tpu_custom_call.1} parent=1 // pred_check_branch
      %12 = sbr.rel (0) target = $region5
    $region4: #{tpu_custom_call.1} parent=1 // pred_region
      %s14 = ssub.s32 64, 64
      %15 = vsyncadd [#allocation3], %s14
      %s17 = sshll.u32 [#allocation2], 4
      %s18 = int_to_ptr.vmem [resolvable:$true] %s17
      %20 = dma.hbm_to_vmem [thread:$0]  %s0, 64, %s18, [#allocation3]
    $region5: #{tpu_custom_call.1} parent=1 // pred_fallthru
      _
    // Predicated region
    $region6: #{tpu_custom_call.1} parent=1 // pred_check
      _
    $region7: #{tpu_custom_call.1} parent=1 // pred_check_branch
      %22 = sbr.rel (0) target = $region9
    $region8: #{tpu_custom_call.1} parent=1 // pred_region
      %s24 = ssub.s32 64, 64
      %25 = vsyncadd [#allocation6], %s24
      %s27 = sshll.u32 [#allocation5], 4
      %s28 = int_to_ptr.vmem [resolvable:$true] %s27
      %30 = dma.hbm_to_vmem [thread:$0]  %s1, 64, %s28, [#allocation6]
    $region9: #{tpu_custom_call.1} parent=1 // pred_fallthru
      _
    // Predicated region
    $region10: #{tpu_custom_call.1} parent=1 // pred_check
      _
    $region11: #{tpu_custom_call.1} parent=1 // pred_check_branch
      %32 = sbr.rel (0) target = $region13
    $region12: #{tpu_custom_call.1} parent=1 // pred_region
      %s34 = ssub.s32 1024, 1024
      %35 = vsyncadd [#allocation6], %s34
      %s36 = sshll.u32 [#allocation7], 4
      %s37 = int_to_ptr.vmem [resolvable:$true] %s36
      %42 = dma.hbm_to_vmem [thread:$0]  %s2, 1024, %s37, [#allocation6], 128, 128, 8
    $region13: #{tpu_custom_call.1} parent=1 // pred_fallthru
      _
    // Predicated region
    $region14: #{tpu_custom_call.1} parent=1 // pred_check
      _
    $region15: #{tpu_custom_call.1} parent=1 // pred_check_branch
      %44 = sbr.rel (0) target = $region17
    $region16: #{tpu_custom_call.1} parent=1 // pred_region
      %45 = dma.done [#allocation3], 64
    $region17: #{tpu_custom_call.1} parent=1 // pred_fallthru
      _
    // Predicated region
    $region18: #{tpu_custom_call.1} parent=1 // pred_check
      _
    $region19: #{tpu_custom_call.1} parent=1 // pred_check_branch
      %47 = sbr.rel (0) target = $region21
    $region20: #{tpu_custom_call.1} parent=1 // pred_region
      %48 = dma.done [#allocation6], 64
    $region21: #{tpu_custom_call.1} parent=1 // pred_fallthru
      _
    // Predicated region
    $region22: #{tpu_custom_call.1} parent=1 // pred_check
      _
    $region23: #{tpu_custom_call.1} parent=1 // pred_check_branch
      %50 = sbr.rel (0) target = $region25
    $region24: #{tpu_custom_call.1} parent=1 // pred_region
      %51 = dma.done [#allocation6], 1024
    $region25: #{tpu_custom_call.1} parent=1 // pred_fallthru
      _
    %v52 = vld [vmem:[#allocation2] sm:$0xf]
    %v53 = vld [vmem:[#allocation5] sm:$0xf]
    %v54 = vlaneseq
    %v55 = vand.u32 %v54, 127
    %v56 = vlaneseq
    %v57 = vshrl.u32 %v56, 7
    %s58 = smul.u32 0, 4
    %v59 = vstv %s58
    %v60 = vadd.s32 %v59, %v57
    %v61 = vmul.u32 %v60, 4
    %62 = vset.pattern.permute.xlu0 0
    %63 = vperm.xlu0 %62, %v53
    %v64 = vpop.permute.xlu0 %63
    %vm65 = vcmp.eq.s32.totalorder %v55, %v64
    %v66 = vand.u32 %v61, 7
    %v67 = vadd.s32 %v66, 5
    %vm68 = vcmp.eq.s32.totalorder %v55, %v67
    %vm69 = vmor %vm65, %vm68
    %v70 = vadd.s32 %v53, 13
    %71 = vset.pattern.permute.xlu0 1
    %72 = vperm.xlu0 %71, %v70
    %v73 = vpop.permute.xlu0 %72
    %vm74 = vcmp.eq.s32.totalorder %v55, %v73
    %vm75 = vmor %vm69, %vm74
    %v76 = vadd.s32 %v61, 1
    %v77 = vand.u32 %v76, 7
    %v78 = vadd.s32 %v77, 18
    %vm79 = vcmp.eq.s32.totalorder %v55, %v78
    %vm80 = vmor %vm75, %vm79
    %v81 = vadd.s32 %v53, 26
    %82 = vset.pattern.permute.xlu0 2
    %83 = vperm.xlu0 %82, %v81
    %v84 = vpop.permute.xlu0 %83
    %vm85 = vcmp.eq.s32.totalorder %v55, %v84
    %vm86 = vmor %vm80, %vm85
    %v87 = vadd.s32 %v61, 2
    %v88 = vand.u32 %v87, 7
    %v89 = vadd.s32 %v88, 31
    %vm90 = vcmp.eq.s32.totalorder %v55, %v89
    %vm91 = vmor %vm86, %vm90
    %v92 = vadd.s32 %v53, 39
    %93 = vset.pattern.permute.xlu0 3
    %94 = vperm.xlu0 %93, %v92
    %v95 = vpop.permute.xlu0 %94
    %vm96 = vcmp.eq.s32.totalorder %v55, %v95
    %vm97 = vmor %vm91, %vm96
    %v98 = vadd.s32 %v61, 3
    %v99 = vand.u32 %v98, 7
    %v100 = vadd.s32 %v99, 44
    %vm101 = vcmp.eq.s32.totalorder %v55, %v100
    %vm102 = vmor %vm97, %vm101
    %v103 = vsel %vm102, 1, 0
    %v104 = vcvt.s32.f32 %v103
    %106 = vrot.lane.b32.xlu0 %v52, 52
    %v107 = vpop.permute.xlu0 %106
    %vm109 = vcmask 424960
    %v110 = vsel %vm109, %v104, %v107
    %v111 = vld [vmem:[#allocation7] sm:$0xff]
    %v112 = vld [vmem:[#allocation7 + $0x8] sm:$0xff]
    %v113 = vld [vmem:[#allocation7 + $0x10] sm:$0xff]
    %v114 = vld [vmem:[#allocation7 + $0x18] sm:$0xff]
    %v115 = vld [vmem:[#allocation7 + $0x20] sm:$0xff]
    %v116 = vld [vmem:[#allocation7 + $0x28] sm:$0xff]
    %v117 = vld [vmem:[#allocation7 + $0x30] sm:$0xff]
    %v118 = vld [vmem:[#allocation7 + $0x38] sm:$0xff]
    %vm119 = vcmask 523264
    %v121 = vsel %vm119, %v110, 0
    %123 = vmatprep.subr.mxu0 0.0
    %124 = vmatpush1.msra.mxu0 %v111
    %125 = vmatprep.subr.mxu0 0.0
    %126 = vmatpush1.msra.mxu0 %v112
    %127 = vmatprep.subr.mxu0 0.0
    %128 = vmatpush1.msra.mxu0 %v113
    %129 = vmatprep.subr.mxu0 0.0
    %130 = vmatpush1.msra.mxu0 %v114
    %131 = vmatprep.subr.mxu0 0.0
    %132 = vmatpush1.msra.mxu0 %v115
    %133 = vmatprep.subr.mxu0 0.0
    %134 = vmatpush1.msra.mxu0 %v116
    %135 = vmatprep.subr.mxu0 0.0
    %136 = vmatpush1.msra.mxu0 %v117
    %137 = vmatprep.subr.mxu0 0.0
    %138 = vmatpush1.msra.mxu0 %v118
    %139 = vmatprep.subr.mxu0 0.0
    %140 = vmatpush1.msra.mxu0 0.0
    %141 = vmatprep.subr.mxu0 0.0
    %142 = vmatpush1.msra.mxu0 0.0
    %143 = vmatprep.subr.mxu0 0.0
    %144 = vmatpush1.msra.mxu0 0.0
    %145 = vmatprep.subr.mxu0 0.0
    %146 = vmatpush1.msra.mxu0 0.0
    %147 = vmatprep.subr.mxu0 0.0
    %148 = vmatpush1.msra.mxu0 0.0
    %149 = vmatprep.subr.mxu0 0.0
    %150 = vmatpush1.msra.mxu0 0.0
    %151 = vmatprep.subr.mxu0 0.0
    %152 = vmatpush1.msra.mxu0 0.0
    %153 = vmatprep.subr.mxu0 0.0
    %154 = vmatpush1.msra.mxu0 0.0
    %155 = vmatprep.subr.mxu0 0.0
    %156 = vmatpush1.msra.mxu0 0.0
    %157 = vmatprep.subr.mxu0 0.0
    %158 = vmatpush1.msra.mxu0 0.0
    %159 = vmatprep.subr.mxu0 0.0
    %160 = vmatpush1.msra.mxu0 0.0
    %161 = vmatprep.subr.mxu0 0.0
    %162 = vmatpush1.msra.mxu0 0.0
    %163 = vmatprep.subr.mxu0 0.0
    %164 = vmatpush1.msra.mxu0 0.0
    %165 = vmatprep.subr.mxu0 0.0
    %166 = vmatpush1.msra.mxu0 0.0
    %167 = vmatprep.subr.mxu0 0.0
    %168 = vmatpush1.msra.mxu0 0.0
    %169 = vmatprep.subr.mxu0 0.0
    %170 = vmatpush1.msra.mxu0 0.0
    %171 = vmatprep.subr.mxu0 0.0
    %172 = vmatpush1.msra.mxu0 0.0
    %173 = vmatprep.subr.mxu0 0.0
    %174 = vmatpush1.msra.mxu0 0.0
    %175 = vmatprep.subr.mxu0 0.0
    %176 = vmatpush1.msra.mxu0 0.0
    %177 = vmatprep.subr.mxu0 0.0
    %178 = vmatpush1.msra.mxu0 0.0
    %179 = vmatprep.subr.mxu0 0.0
    %180 = vmatpush1.msra.mxu0 0.0
    %181 = vmatprep.subr.mxu0 0.0
    %182 = vmatpush1.msra.mxu0 0.0
    %183 = vmatprep.subr.mxu0 0.0
    %184 = vmatpush1.msra.mxu0 0.0
    %185 = vmatprep.subr.mxu0 0.0
    %186 = vmatpush1.msra.mxu0 0.0
    %187 = vmatprep.mubr.f32.mxu0 0.0
    %188 = vmatmul.mubr.f32.gmra.mrb[0].mxu0 %v121
    %v189 = vpop.f32.mrb[0].mxu0
    %v190 = vadd.f32 0.0, %v189
    %v191 = vpop.f32.mrb[0].mxu0
    %192 = vdwg.mxu0
    %193 = vst [vmem:[#allocation8] sm:$0xf] %v190
    // Predicated region
    $region26: #{tpu_custom_call.1} parent=1 // pred_check
      _
    $region27: #{tpu_custom_call.1} parent=1 // pred_check_branch
      %195 = sbr.rel (0) target = $region29
    $region28: #{tpu_custom_call.1} parent=1 // pred_region
      %s197 = ssub.s32 64, 64
      %198 = vsyncadd [#allocation4], %s197
      %s200 = sshll.u32 [#allocation8], 4
      %s201 = int_to_ptr.vmem [resolvable:$true] %s200
      %203 = dma.vmem_to_hbm [thread:$0]  %s201, 64, %s3, [#allocation4]
    $region29: #{tpu_custom_call.1} parent=1 // pred_fallthru
      _
    // Predicated region
    $region30: #{tpu_custom_call.1} parent=1 // pred_check
      _
    $region31: #{tpu_custom_call.1} parent=1 // pred_check_branch
      %205 = sbr.rel (0) target = $region33
    $region32: #{tpu_custom_call.1} parent=1 // pred_region
      %206 = dma.done [#allocation4], 64
    $region33: #{tpu_custom_call.1} parent=1 // pred_fallthru
      _
    %207 = vsyncpa [#allocation3], 1
    %208 = vsyncpa [#allocation6], 1
    %209 = vsyncpa [#allocation4], 1

</llo_original>
